<compile_context>
chip_gen: v7x
topology: tpu7x:2x2x1
jax: 0.10.0
libtpu: 0.0.40
codegen_flags: <defaults>
</compile_context>

<pallas_src>
import math
from functools import partial

import jax
import jax.numpy as jnp
from jax.experimental import pallas as pl
from jax.experimental.pallas import tpu as pltpu


# ----------------------------- Pallas kernel ---------------------------------

def _conv_bn_lrelu_kernel(w_ref, p_ref, shift_ref, o_ref):
    # w_ref:     (Cout, Kdim)  BN-scale-folded conv weight (bf16), transposed
    # p_ref:     (Kdim, TM)    transposed im2col patch tile (bf16)
    # shift_ref: (Cout, 1)     fused BN shift (beta - mean * scale), f32
    # o_ref:     (Cout, TM)    lane-dense output tile (f32)
    acc = jnp.dot(w_ref[...], p_ref[...], preferred_element_type=jnp.float32)
    y = acc + shift_ref[...]
    # LeakyReLU(0.01): max(y, 0.01*y) == y for y>=0, 0.01*y for y<0.
    y = jnp.maximum(y, 0.01 * y)
    o_ref[...] = y.astype(o_ref.dtype)


def _round_up(a, b):
    return ((a + b - 1) // b) * b


def _choose_m_tiling(m):
    """Return (tm, mp): lane-aligned tile and padded M with mp % tm == 0."""
    if m <= 256:
        tm = _round_up(m, 128)          # single grid step: overhead-dominated
        return tm, tm
    max_tm = 2048                        # keeps per-block VMEM tiny, big lane runs
    ntiles = max(2, -(-m // max_tm))     # >=2 blocks -> megacore on v7x/v5p
    tm = min(_round_up(-(-m // ntiles), 128), max_tm)
    mp = _round_up(m, tm)
    return tm, mp


def _conv_matmul_pallas(w_t, patches_t, shift):
    """w_t: (Cout, Kdim) bf16, patches_t: (Kdim, M) bf16, shift: (Cout, 1) f32."""
    cout, kdim = w_t.shape
    m = patches_t.shape[1]

    tm, mp = _choose_m_tiling(m)
    if mp != m:
        patches_t = jnp.pad(patches_t, ((0, 0), (0, mp - m)))
    grid_m = mp // tm

    out = pl.pallas_call(
        _conv_bn_lrelu_kernel,
        out_shape=jax.ShapeDtypeStruct((cout, mp), jnp.float32),
        grid_spec=pltpu.PrefetchScalarGridSpec(
            num_scalar_prefetch=0,
            grid=(grid_m,),
            in_specs=[
                pl.BlockSpec((cout, kdim), lambda i: (0, 0)),     # full weight
                pl.BlockSpec((kdim, tm), lambda i: (0, i)),       # M-tiled patches
                pl.BlockSpec((cout, 1), lambda i: (0, 0)),        # BN shift
            ],
            out_specs=pl.BlockSpec((cout, tm), lambda i: (0, i)),
        ),
        compiler_params=pltpu.CompilerParams(
            dimension_semantics=("parallel",)),
    )(w_t, patches_t, shift)

    return out[:, :m]


# ------------------------------- glue (JAX) -----------------------------------

def _im2col(x_nhwc, kernel, stride, pad):
    """pad = (top, bottom, left, right). Returns (patches[M, k*k*Cin], OH, OW)."""
    n, h, w, c = x_nhwc.shape
    xp = jnp.pad(x_nhwc, ((0, 0), (pad[0], pad[1]), (pad[2], pad[3]), (0, 0)))
    hp, wp = xp.shape[1], xp.shape[2]
    oh = (hp - kernel) // stride + 1
    ow = (wp - kernel) // stride + 1
    cols = []
    for i in range(kernel):          # kh
        for j in range(kernel):      # kw
            cols.append(
                xp[:, i:i + stride * (oh - 1) + 1:stride,
                      j:j + stride * (ow - 1) + 1:stride, :])
    # feature order = (kh, kw, cin), matching weight flattening below
    patches = jnp.concatenate(cols, axis=-1).reshape(n * oh * ow, kernel * kernel * c)
    return patches, oh, ow


def yolo_conv_layer(x_nchw, weight, bn_gamma, bn_beta, bn_mean, bn_var,
                    *, kernel, stride, bn=True, use_activation=True, eps=1e-5):
    """Forward of YoloConvLayer.  x_nchw: (N, Cin, H, W), weight: (Cout, Cin, k, k)."""
    assert bn and use_activation, "this synthetic instance fuses BN + LeakyReLU"
    n, cin, h, w = x_nchw.shape
    cout = weight.shape[0]

    # padding: stride>1 -> ZeroPad2d((1,0,1,0)); stride==1 -> dynamic SAME padding
    if stride > 1:
        pad = (1, 0, 1, 0)  # top, bottom, left, right
    else:
        ph = max((math.ceil(h / stride) - 1) * stride + kernel - h, 0)
        pw = max((math.ceil(w / stride) - 1) * stride + kernel - w, 0)
        pad = (ph // 2, ph - ph // 2, pw // 2, pw - pw // 2)

    x_nhwc = jnp.transpose(x_nchw, (0, 2, 3, 1))
    patches, oh, ow = _im2col(x_nhwc, kernel, stride, pad)        # (M, Kdim)

    # weight (Cout, Cin, kh, kw) -> (Cout, kh, kw, Cin) -> (Cout, k*k*Cin)
    # (feature order (kh, kw, cin) matches the im2col ordering above)
    w_t = jnp.transpose(weight, (0, 2, 3, 1)).reshape(cout, kernel * kernel * cin)

    # fused eval-mode BatchNorm: fold scale into weights, keep shift separate
    scale = (bn_gamma / jnp.sqrt(bn_var + eps)).astype(jnp.float32)       # (Cout,)
    shift = (bn_beta - bn_mean * scale).reshape(cout, 1).astype(jnp.float32)

    w_t_scaled = (w_t.astype(jnp.float32) * scale[:, None]).astype(jnp.bfloat16)
    patches_t = patches.T.astype(jnp.bfloat16)                    # (Kdim, M)

    out_t = _conv_matmul_pallas(w_t_scaled, patches_t, shift)     # (Cout, M) f32
    # (Cout, N*OH*OW) -> (N, Cout, OH, OW)
    out = out_t.reshape(cout, n, oh, ow).transpose(1, 0, 2, 3)
    return out


# --------------------------------- main ---------------------------------------

if __name__ == "__main__":
    # ConvLayerParam(in_channels=4, out_channels=8, kernel=3, stride=1,
    #                use_activation=True, bn=True)
    N, CIN, H, W = 2, 4, 16, 16
    COUT, K, STRIDE = 8, 3, 1

    key = jax.random.PRNGKey(0)
    kx, kw, kg, kb = jax.random.split(key, 4)

    x = jax.random.normal(kx, (N, CIN, H, W), dtype=jnp.float32)

    # kaiming_normal_(mode='fan_out'): std = sqrt(2 / (Cout * k * k))
    fan_out = COUT * K * K
    weight = jax.random.normal(kw, (COUT, CIN, K, K), dtype=jnp.float32) * math.sqrt(2.0 / fan_out)

    # deterministic BatchNorm params (fresh module: running_mean=0, running_var=1)
    bn_gamma = 1.0 + 0.1 * jax.random.normal(kg, (COUT,), dtype=jnp.float32)
    bn_beta = 0.1 * jax.random.normal(kb, (COUT,), dtype=jnp.float32)
    bn_mean = jnp.zeros((COUT,), dtype=jnp.float32)
    bn_var = jnp.ones((COUT,), dtype=jnp.float32)

    fwd = jax.jit(partial(yolo_conv_layer, kernel=K, stride=STRIDE,
                          bn=True, use_activation=True))
    out = fwd(x, weight, bn_gamma, bn_beta, bn_mean, bn_var)
    jax.block_until_ready(out)

    assert out.shape == (N, COUT, H, W), out.shape

    # quick reference check against plain-JAX conv + BN + LeakyReLU
    ref = jax.lax.conv_general_dilated(
        x, weight, window_strides=(STRIDE, STRIDE), padding="SAME",
        dimension_numbers=("NCHW", "OIHW", "NCHW"))
    scale = bn_gamma / jnp.sqrt(bn_var + 1e-5)
    shift = bn_beta - bn_mean * scale
    ref = ref * scale[None, :, None, None] + shift[None, :, None, None]
    ref = jnp.where(ref >= 0, ref, 0.01 * ref)
    # bf16 GEMM operands -> loosened tolerance vs f32 reference
    assert jnp.max(jnp.abs(out - ref)) < 5e-2, float(jnp.max(jnp.abs(out - ref)))

    print("KERNEL_OK")
</pallas_src>

<mosaic_0001>
module attributes {stable_mosaic.version = 11 : i64} {
  func.func @_conv_bn_lrelu_kernel(%arg0: i32, %arg1: memref<8x36xbf16, #tpu.memory_space<vmem>>, %arg2: memref<36x256xbf16, #tpu.memory_space<vmem>>, %arg3: memref<8x1xf32, #tpu.memory_space<vmem>>, %arg4: memref<8x256xf32, #tpu.memory_space<vmem>>) attributes {dimension_semantics = [#tpu.dimension_semantics<parallel>], iteration_bounds = array<i64: 2>, scalar_prefetch = 0 : i64, scratch_operands = 0 : i64, tpu.core_type = #tpu.core_type<tc>, window_params = [{pipeline_mode = #tpu.pipeline_mode<synchronous>, transform_indices = @transform_0, window_bounds = array<i64: 8, 36>}, {transform_indices = @transform_1, window_bounds = array<i64: 36, 256>}, {pipeline_mode = #tpu.pipeline_mode<synchronous>, transform_indices = @transform_2, window_bounds = array<i64: 8, 1>}, {transform_indices = @transform_3, window_bounds = array<i64: 8, 256>}]} {
    %c0 = arith.constant 0 : index
    %c0_0 = arith.constant 0 : index
    %0 = vector.load %arg1[%c0, %c0_0] : memref<8x36xbf16, #tpu.memory_space<vmem>>, vector<8x36xbf16>
    %c0_1 = arith.constant 0 : index
    %c0_2 = arith.constant 0 : index
    %1 = vector.load %arg2[%c0_1, %c0_2] : memref<36x256xbf16, #tpu.memory_space<vmem>>, vector<36x256xbf16>
    %cst = arith.constant dense<0.000000e+00> : vector<8x256xf32>
    %2 = tpu.matmul %0, %1, %cst {dimension_numbers = #tpu.dot_dimension_numbers<[1], [0], [0], [1], [0, 0, 1, 1], [], []>} : vector<8x36xbf16>, vector<36x256xbf16>, vector<8x256xf32> -> vector<8x256xf32>
    %c0_3 = arith.constant 0 : index
    %c0_4 = arith.constant 0 : index
    %3 = vector.load %arg3[%c0_3, %c0_4] : memref<8x1xf32, #tpu.memory_space<vmem>>, vector<8x1xf32>
    %4 = vector.broadcast %3 : vector<8x1xf32> to vector<8x256xf32>
    %5 = arith.addf %2, %4 : vector<8x256xf32>
    %cst_5 = arith.constant 0.00999999977 : f32
    %6 = vector.broadcast %cst_5 : f32 to vector<8x256xf32>
    %7 = arith.mulf %6, %5 : vector<8x256xf32>
    %8 = arith.maximumf %5, %7 : vector<8x256xf32>
    %c0_6 = arith.constant 0 : index
    %c0_7 = arith.constant 0 : index
    %9 = vector.load %arg4[%c0_6, %c0_7] : memref<8x256xf32, #tpu.memory_space<vmem>>, vector<8x256xf32>
    tpu.vector_store %arg4[%c0_6, %c0_7], %8 {strides = array<i32>} : memref<8x256xf32, #tpu.memory_space<vmem>>, vector<8x256xf32>,
    return
  }
  func.func @transform_0(%arg0: i32) -> (i32, i32) {
    %c0_i32 = arith.constant 0 : i32
    %c0_i32_0 = arith.constant 0 : i32
    %c0_i32_1 = arith.constant 0 : i32
    return %c0_i32, %c0_i32_0 : i32, i32
  }
  func.func @transform_1(%arg0: i32) -> (i32, i32) {
    %c0_i32 = arith.constant 0 : i32
    %c0_i32_0 = arith.constant 0 : i32
    return %c0_i32, %arg0 : i32, i32
  }
  func.func @transform_2(%arg0: i32) -> (i32, i32) {
    %c0_i32 = arith.constant 0 : i32
    %c0_i32_0 = arith.constant 0 : i32
    %c0_i32_1 = arith.constant 0 : i32
    return %c0_i32, %c0_i32_0 : i32, i32
  }
  func.func @transform_3(%arg0: i32) -> (i32, i32) {
    %c0_i32 = arith.constant 0 : i32
    %c0_i32_0 = arith.constant 0 : i32
    return %c0_i32, %arg0 : i32, i32
  }
}

</mosaic_0001>

<llo_original>
// kernel: yolo_conv_layer.1
$region0: #{yolo_conv_layer.1}
  #allocation0 [shape = 'u32[]', space=smem, size = 0x4, offset = 0x4, fixed_abs, tag = 'smem constant byte address 0x4 - core index']
  #allocation1 [shape = 'u32[144,128]{1,0:T(1,128)}', space=vmem, size = 0x12000, scoped, tag = 'internal scratch']
  %s0 = inlined_call_operand.vmem [shape: bf16[8,36], index: 0, kind: input, shape index: {}]
  %s1 = inlined_call_operand.vmem [shape: bf16[36,512], index: 1, kind: input, shape index: {}]
  %s2 = inlined_call_operand.vmem [shape: f32[8,1], index: 2, kind: input, shape index: {}]
  %s3 = inlined_call_operand.vmem [shape: f32[8,512], index: 3, kind: output, shape index: {}]
  %s4 = sld [smem:[#allocation0]]
  $region83: #{yolo_conv_layer.1} parent=0
    _
  %s6 = ssub.s32 1, %s4
  %s7 = scalar_select 0, %s6, %s4
  $region1: #{yolo_conv_layer.1} parent=0
    #allocation2 [shape = 'u8[40960]{0}', space=vmem, size = 0xa000, scoped, tag = 'input window, operand 1']
    loop: start=0, step=1, limit=4
    $region2: #{yolo_conv_layer.1} parent=1 // loop_pre_header
      _
    $region3: #{yolo_conv_layer.1} parent=1 // loop_header
      %s9 = sphi 0, %s13
      %p10 = scmp.ge.s32.totalorder %s9, 4
      %s17 = sphi 0, %s17
      %s19 = sphi 0, %s17
      %s20 = sphi 0, %s19
      %s34 = sphi 0, %s20
      %s40 = sphi 0, %s42
      %s43 = sphi 0, %s40
      %s44 = sphi 0, %s43
      %s60 = sphi 0, %s44
      %s64 = sphi 0, %s64
      %s66 = sphi 0, %s64
      %s67 = sphi 0, %s66
      %s81 = sphi 0, %s67
      %s87 = sphi 0, %s89
      %s90 = sphi 0, %s87
      %s91 = sphi 0, %s90
      %s107 = sphi 0, %s91
    $region4: #{yolo_conv_layer.1} parent=1 // loop_header_branch
      %12 = sbr.rel (%p10) target = $region8
    $region5: #{yolo_conv_layer.1} parent=1 // loop_body
      %s14 = ssub.s32 %s9, 1
      %s15 = ssub.s32 %s9, 2
      %s16 = sadd.s32 %s9, 1
      %s18 = sadd.s32 %s17, 1
      %p21 = scmp.eq.s32.totalorder %s9, 1
      %p22 = scmp.ne.s32.totalorder %s17, %s19
      %p23 = scmp.eq.s32.totalorder %s9, 0
      %p24 = por %p22, %p23
      %p25 = scmp.ne.s32.totalorder %s17, %s19
      %p26 = scmp.eq.s32.totalorder %s14, 1
      %p27 = por %p25, %p26
      %p28 = scmp.ne.s32.totalorder %s19, %s20
      %p29 = scmp.eq.s32.totalorder %s14, 0
      %p30 = por %p28, %p29
      %p31 = scmp.ne.s32.totalorder %s19, %s20
      %p32 = scmp.eq.s32.totalorder %s15, 1
      %p33 = por %p31, %p32
      %p35 = scmp.ne.s32.totalorder %s20, %s34
      %p36 = scmp.eq.s32.totalorder %s15, 0
      %p37 = por %p35, %p36
      %s38 = ssub.s32 %s9, %s16
      %p39 = scmp.eq.s32.totalorder %s38, 0
      %s41 = sadd.s32 %s40, 1
      %s42 = scalar_select %p39, %s40, %s41
      %p45 = pneg %p39
      %p46 = scmp.eq.s32.totalorder %s9, 1
      %p47 = por %p45, %p46
      %p48 = scmp.ne.s32.totalorder %s40, %s43
      %p49 = scmp.eq.s32.totalorder %s9, 0
      %p50 = por %p48, %p49
      %p51 = scmp.ne.s32.totalorder %s40, %s43
      %p52 = scmp.eq.s32.totalorder %s14, 1
      %p53 = por %p51, %p52
      %p54 = scmp.ne.s32.totalorder %s43, %s44
      %p55 = scmp.eq.s32.totalorder %s14, 0
      %p56 = por %p54, %p55
      %p57 = scmp.ne.s32.totalorder %s43, %s44
      %p58 = scmp.eq.s32.totalorder %s15, 1
      %p59 = por %p57, %p58
      %p61 = scmp.ne.s32.totalorder %s44, %s60
      %p62 = scmp.eq.s32.totalorder %s15, 0
      %p63 = por %p61, %p62
      %s65 = sadd.s32 %s64, 1
      %p68 = scmp.eq.s32.totalorder %s9, 1
      %p69 = scmp.ne.s32.totalorder %s64, %s66
      %p70 = scmp.eq.s32.totalorder %s9, 0
      %p71 = por %p69, %p70
      %p72 = scmp.ne.s32.totalorder %s64, %s66
      %p73 = scmp.eq.s32.totalorder %s14, 1
      %p74 = por %p72, %p73
      %p75 = scmp.ne.s32.totalorder %s66, %s67
      %p76 = scmp.eq.s32.totalorder %s14, 0
      %p77 = por %p75, %p76
      %p78 = scmp.ne.s32.totalorder %s66, %s67
      %p79 = scmp.eq.s32.totalorder %s15, 1
      %p80 = por %p78, %p79
      %p82 = scmp.ne.s32.totalorder %s67, %s81
      %p83 = scmp.eq.s32.totalorder %s15, 0
      %p84 = por %p82, %p83
      %s85 = ssub.s32 %s9, %s16
      %p86 = scmp.eq.s32.totalorder %s85, 0
      %s88 = sadd.s32 %s87, 1
      %s89 = scalar_select %p86, %s87, %s88
      %p92 = pneg %p86
      %p93 = scmp.eq.s32.totalorder %s9, 1
      %p94 = por %p92, %p93
      %p95 = scmp.ne.s32.totalorder %s87, %s90
      %p96 = scmp.eq.s32.totalorder %s9, 0
      %p97 = por %p95, %p96
      %p98 = scmp.ne.s32.totalorder %s87, %s90
      %p99 = scmp.eq.s32.totalorder %s14, 1
      %p100 = por %p98, %p99
      %p101 = scmp.ne.s32.totalorder %s90, %s91
      %p102 = scmp.eq.s32.totalorder %s14, 0
      %p103 = por %p101, %p102
      %p104 = scmp.ne.s32.totalorder %s90, %s91
      %p105 = scmp.eq.s32.totalorder %s15, 1
      %p106 = por %p104, %p105
      %p108 = scmp.ne.s32.totalorder %s91, %s107
      %p109 = scmp.eq.s32.totalorder %s15, 0
      %p110 = por %p108, %p109
      %p111 = scmp.le.s32.totalorder 1, %s9
      %p112 = scmp.lt.s32.totalorder %s9, 3
      %p113 = pnand %p111, %p112
      %p114 = pneg %p113
      // Predicated region
      $region9: #{yolo_conv_layer.1} parent=5 // pred_check
        _
      $region10: #{yolo_conv_layer.1} parent=5 // pred_check_branch
        %116 = sbr.rel (%p113) target = $region12
      $region11: #{yolo_conv_layer.1} parent=5 // pred_region
        %s117 = ssub.s32 %s9, 1
        // Predicated region
        $region13: #{yolo_conv_layer.1} parent=11 // pred_check
          %p118 = pneg %p30
        $region14: #{yolo_conv_layer.1} parent=11 // pred_check_branch
          %120 = sbr.rel (%p118) target = $region16
        $region15: #{yolo_conv_layer.1} parent=11 // pred_region
          _
        $region16: #{yolo_conv_layer.1} parent=11 // pred_fallthru
          _
        // Predicated region
        $region17: #{yolo_conv_layer.1} parent=11 // pred_check
          %p121 = pneg %p77
        $region18: #{yolo_conv_layer.1} parent=11 // pred_check_branch
          %123 = sbr.rel (%p121) target = $region20
        $region19: #{yolo_conv_layer.1} parent=11 // pred_region
          _
        $region20: #{yolo_conv_layer.1} parent=11 // pred_fallthru
          _
      $region12: #{yolo_conv_layer.1} parent=5 // pred_fallthru
        _
      %p124 = scmp.lt.s32.totalorder %s9, 2
      // Predicated region
      $region21: #{yolo_conv_layer.1} parent=5 // pred_check
        %p125 = pneg %p124
      $region22: #{yolo_conv_layer.1} parent=5 // pred_check_branch
        %127 = sbr.rel (%p125) target = $region24
      $region23: #{yolo_conv_layer.1} parent=5 // pred_region
        // Predicated region
        $region25: #{yolo_conv_layer.1} parent=23 // pred_check
          %p128 = pneg %p50
        $region26: #{yolo_conv_layer.1} parent=23 // pred_check_branch
          %130 = sbr.rel (%p128) target = $region28
        $region27: #{yolo_conv_layer.1} parent=23 // pred_region
          %s131 = sand.u32 %s40, 1
          %s132 = sand.u32 %s40, 1
          %s133 = smul.addr %s132, 40
          %s134 = scalar_lea.vmem [#allocation2], %s133
          %s135 = smul.u32 2, %s9
          %s136 = smul.addr %s135, 4
          %s137 = scalar_lea.vmem %s1, %s136
          // Predicated region
          $region29: #{yolo_conv_layer.1} parent=27 // pred_check
            _
          $region30: #{yolo_conv_layer.1} parent=27 // pred_check_branch
            %139 = sbr.rel (0) target = $region32
          $region31: #{yolo_conv_layer.1} parent=27 // pred_region
            // Predicated region
            $region33: #{yolo_conv_layer.1} parent=31 // pred_check
              _
            $region34: #{yolo_conv_layer.1} parent=31 // pred_check_branch
              %141 = sbr.rel (0) target = $region36
            $region35: #{yolo_conv_layer.1} parent=31 // pred_region
              // Predicated region
              $region48: #{yolo_conv_layer.1} parent=35 // pred_check
                _
              $region49: #{yolo_conv_layer.1} parent=35 // pred_check_branch
                %164 = sbr.rel (0) target = $region51
              $region50: #{yolo_conv_layer.1} parent=35 // pred_region
                loop: start=0, step=1, limit=1
                $region52: #{yolo_conv_layer.1} parent=50 // loop_pre_header
                  _
                $region53: #{yolo_conv_layer.1} parent=50 // loop_header
                  %s166 = sphi 0, %s170
                  %p167 = scmp.ge.s32.totalorder %s166, 1
                  %s171 = sphi %s137, %s137
                  %s172 = sphi %s134, %s134
                $region54: #{yolo_conv_layer.1} parent=50 // loop_header_branch
                  %169 = sbr.rel (%p167) target = $region58
                $region55: #{yolo_conv_layer.1} parent=50 // loop_body
                  %v173 = vld [vmem:[%s171] sm:$0xff]
                  %174 = vst [vmem:[%s172] sm:$0xff] %v173
                  %v175 = vld [vmem:[%s171 + $0x10] sm:$0xff]
                  %176 = vst [vmem:[%s172 + $0x8] sm:$0xff] %v175
                  %v177 = vld [vmem:[%s171 + $0x20] sm:$0xff]
                  %178 = vst [vmem:[%s172 + $0x10] sm:$0xff] %v177
                  %v179 = vld [vmem:[%s171 + $0x30] sm:$0xff]
                  %180 = vst [vmem:[%s172 + $0x18] sm:$0xff] %v179
                  %v181 = vld [vmem:[%s171 + $0x40] sm:$0xff]
                  %182 = vst [vmem:[%s172 + $0x20] sm:$0xff] %v181
                $region56: #{yolo_conv_layer.1} parent=50 // loop_footer
                  %s170 = sadd.s32 1, %s166
                $region57: #{yolo_conv_layer.1} parent=50 // loop_footer_branch
                  %165 = sbr.rel target = $region53
                $region58: #{yolo_conv_layer.1} parent=50 // loop_exit
                  _
              $region51: #{yolo_conv_layer.1} parent=35 // pred_fallthru
                _
              // Predicated region
              $region59: #{yolo_conv_layer.1} parent=35 // pred_check
                _
              $region60: #{yolo_conv_layer.1} parent=35 // pred_check_branch
                %184 = sbr.rel target = $region62
              $region61: #{yolo_conv_layer.1} parent=35 // pred_region
                _
              $region62: #{yolo_conv_layer.1} parent=35 // pred_fallthru
                _
            $region36: #{yolo_conv_layer.1} parent=31 // pred_fallthru
              _
            // Predicated region
            $region37: #{yolo_conv_layer.1} parent=31 // pred_check
              _
            $region38: #{yolo_conv_layer.1} parent=31 // pred_check_branch
              %143 = sbr.rel target = $region40
            $region39: #{yolo_conv_layer.1} parent=31 // pred_region
              loop: start=0, step=1, limit=1
              $region41: #{yolo_conv_layer.1} parent=39 // loop_pre_header
                _
              $region42: #{yolo_conv_layer.1} parent=39 // loop_header
                %s146 = sphi 0, %s150
                %p147 = scmp.ge.s32.totalorder %s146, 1
                %s151 = sphi %s137, %s137
                %s152 = sphi %s134, %s134
              $region43: #{yolo_conv_layer.1} parent=39 // loop_header_branch
                %149 = sbr.rel (%p147) target = $region47
              $region44: #{yolo_conv_layer.1} parent=39 // loop_body
                %v153 = vld [vmem:[%s151] sm:$0xff]
                %154 = vst [vmem:[%s152] sm:$0xff] %v153
                %v155 = vld [vmem:[%s151 + $0x10] sm:$0xff]
                %156 = vst [vmem:[%s152 + $0x8] sm:$0xff] %v155
                %v157 = vld [vmem:[%s151 + $0x20] sm:$0xff]
                %158 = vst [vmem:[%s152 + $0x10] sm:$0xff] %v157
                %v159 = vld [vmem:[%s151 + $0x30] sm:$0xff]
                %160 = vst [vmem:[%s152 + $0x18] sm:$0xff] %v159
                %v161 = vld [vmem:[%s151 + $0x40] sm:$0xff]
                %162 = vst [vmem:[%s152 + $0x20] sm:$0xff] %v161
              $region45: #{yolo_conv_layer.1} parent=39 // loop_footer
                %s150 = sadd.s32 1, %s146
              $region46: #{yolo_conv_layer.1} parent=39 // loop_footer_branch
                %145 = sbr.rel target = $region42
              $region47: #{yolo_conv_layer.1} parent=39 // loop_exit
                _
            $region40: #{yolo_conv_layer.1} parent=31 // pred_fallthru
              _
          $region32: #{yolo_conv_layer.1} parent=27 // pred_fallthru
            _
          %185 = vnop
        $region28: #{yolo_conv_layer.1} parent=23 // pred_fallthru
          _
      $region24: #{yolo_conv_layer.1} parent=5 // pred_fallthru
        _
      %p186 = scmp.le.s32.totalorder 1, %s9
      %p187 = scmp.lt.s32.totalorder %s9, 3
      %p188 = pnand %p186, %p187
      %p189 = pneg %p188
      // Predicated region
      $region63: #{yolo_conv_layer.1} parent=5 // pred_check
        _
      $region64: #{yolo_conv_layer.1} parent=5 // pred_check_branch
        %191 = sbr.rel (%p188) target = $region66
      $region65: #{yolo_conv_layer.1} parent=5 // pred_region
        %s192 = ssub.s32 %s9, 1
        %s193 = sand.u32 %s43, 1
        %s194 = sand.u32 %s43, 1
        %s195 = smul.addr %s194, 40
        %s196 = scalar_lea.vmem [#allocation2], %s195
        // Predicated region
        $region67: #{yolo_conv_layer.1} parent=65 // pred_check
          %p197 = pneg %p56
        $region68: #{yolo_conv_layer.1} parent=65 // pred_check_branch
          %199 = sbr.rel (%p197) target = $region70
        $region69: #{yolo_conv_layer.1} parent=65 // pred_region
          _
        $region70: #{yolo_conv_layer.1} parent=65 // pred_fallthru
          _
        %p200 = pneg %p30
        %p201 = pneg %p27
        %s202 = sand.u32 %s43, 1
        %s203 = sand.u32 %s43, 1
        %s204 = smul.addr %s203, 40
        %s205 = scalar_lea.vmem [#allocation2], %s204
        %p206 = pneg %p56
        %p207 = pneg %p53
        %p208 = pneg %p77
        %p209 = pneg %p74
        %p210 = pneg %p103
        %p211 = pneg %p100
        %s212 = smul.u32 2, %s14
        %p213 = scmp.lt.s32.totalorder %s212, 3
        %s214 = scalar_select %p213, %s212, 3
        %s215 = smul.addr %s214, 8
        %s216 = scalar_lea.vmem %s3, %s215
        %s217 = smul.u32 2, %s14
        %s218 = smul.u32 2, %s14
        %p219 = scmp.lt.s32.totalorder %s218, 3
        %s220 = scalar_select %p219, %s218, 3
        %s221 = smul.addr %s220, 8
        %s222 = scalar_lea.vmem %s3, %s221
        %s223 = smul.u32 2, %s14
        %v225 = vld [vmem:[%s0] sm:$0xf]
        %v226 = vld [vmem:[%s196] sm:$0xff]
        %v227 = vld [vmem:[%s196 + $0x8] sm:$0xff]
        %v228 = vld [vmem:[%s196 + $0x10] sm:$0xff]
        %v229 = vld [vmem:[%s196 + $0x18] sm:$0xff]
        %v230 = vld [vmem:[%s196 + $0x20] sm:$0x33]
        %v231 = vld [vmem:[%s2] sm:$0xff]
        %233 = vset.pattern.permute.xlu0 0
        %234 = vperm.xlu0 %233, %v231
        %v235 = vpop.permute.xlu0 %234
        %v242 = vunpack.c.l.b16 %v226
        %v243 = vunpack.c.h.b16 %v226
        %v244 = vunpack.c.l.b16 %v227
        %v245 = vunpack.c.h.b16 %v227
        %v246 = vunpack.c.l.b16 %v228
        %v247 = vunpack.c.h.b16 %v228
        %v248 = vunpack.c.l.b16 %v229
        %v249 = vunpack.c.h.b16 %v229
        %v250 = vunpack.c.l.b16 %v230
        %v251 = vunpack.c.h.b16 %v230
        %v252 = vpack.c.b16 %v244, %v242
        %v253 = vpack.c.b16 %v245, %v243
        %v254 = vpack.c.b16 %v248, %v246
        %v255 = vpack.c.b16 %v249, %v247
        %v256 = vpack.c.b16 %v250, %v250
        %v257 = vpack.c.b16 %v251, %v251
        %vm262 = vcmask 293888
        %v264 = vsel %vm262, %v225, 0
        %vm266 = vcmask 1041408
        %v268 = vsel %vm266, %v256, 0
        %v271 = vsel %vm266, %v257, 0
        %273 = vmatprep.subr.bf16.mxu0 %v253
        %274 = vmatpush1.bf16.msra.mxu0 %v252
        %275 = vmatprep.subr.bf16.mxu0 %v255
        %276 = vmatpush1.bf16.msra.mxu0 %v254
        %277 = vmatprep.subr.bf16.mxu0 %v271
        %278 = vmatpush1.bf16.msra.mxu0 %v268
        %279 = vmatprep.subr.bf16.mxu0 0
        %280 = vmatpush1.bf16.msra.mxu0 0
        %281 = vmatprep.subr.bf16.mxu0 0
        %282 = vmatpush1.bf16.msra.mxu0 0
        %283 = vmatprep.subr.bf16.mxu0 0
        %284 = vmatpush1.bf16.msra.mxu0 0
        %285 = vmatprep.subr.bf16.mxu0 0
        %286 = vmatpush1.bf16.msra.mxu0 0
        %287 = vmatprep.subr.bf16.mxu0 0
        %288 = vmatpush1.bf16.msra.mxu0 0
        %289 = vmatprep.subr.bf16.mxu0 0
        %290 = vmatpush1.bf16.msra.mxu0 0
        %291 = vmatprep.subr.bf16.mxu0 0
        %292 = vmatpush1.bf16.msra.mxu0 0
        %293 = vmatprep.subr.bf16.mxu0 0
        %294 = vmatpush1.bf16.msra.mxu0 0
        %295 = vmatprep.subr.bf16.mxu0 0
        %296 = vmatpush1.bf16.msra.mxu0 0
        %297 = vmatprep.subr.bf16.mxu0 0
        %298 = vmatpush1.bf16.msra.mxu0 0
        %299 = vmatprep.subr.bf16.mxu0 0
        %300 = vmatpush1.bf16.msra.mxu0 0
        %301 = vmatprep.subr.bf16.mxu0 0
        %302 = vmatpush1.bf16.msra.mxu0 0
        %303 = vmatprep.subr.bf16.mxu0 0
        %304 = vmatpush1.bf16.msra.mxu0 0
        %305 = vmatprep.mubr.bf16.mxu0 0
        %306 = vmatmul.mubr.bf16.gmra.mrb[0].mxu0 %v264
        %v307 = vpop.f32.mrb[0].mxu0
        %v308 = vadd.f32 %v235, %v307
        %v309 = vpop.f32.mrb[0].mxu0
        %v310 = vadd.f32 %v235, %v309
        %v311 = vpop.f32.mrb[0].mxu0
        %v312 = vpop.f32.mrb[0].mxu0
        %313 = vdwg.mxu0
        %v314 = vmul.f32 %v308, 0.01
        %v315 = vmul.f32 %v310, 0.01
        %v316 = vmax.f32 %v308, %v314
        %v317 = vmax.f32 %v310, %v315
        %318 = vst [vmem:[%s222] sm:$0xff] %v316
        %319 = vst [vmem:[%s222 + $0x8] sm:$0xff] %v317
        %s320 = smul.u32 2, %s14
        %p321 = scmp.lt.s32.totalorder %s320, 3
        %s322 = scalar_select %p321, %s320, 3
        %s323 = smul.addr %s322, 8
        %s324 = scalar_lea.vmem %s3, %s323
        // Predicated region
        $region71: #{yolo_conv_layer.1} parent=65 // pred_check
          %p325 = pneg %p100
        $region72: #{yolo_conv_layer.1} parent=65 // pred_check_branch
          %327 = sbr.rel (%p325) target = $region74
        $region73: #{yolo_conv_layer.1} parent=65 // pred_region
          %s328 = smul.u32 2, %s14
        $region74: #{yolo_conv_layer.1} parent=65 // pred_fallthru
          _
      $region66: #{yolo_conv_layer.1} parent=5 // pred_fallthru
        _
      %p329 = scmp.le.s32.totalorder 2, %s9
      // Predicated region
      $region75: #{yolo_conv_layer.1} parent=5 // pred_check
        %p330 = pneg %p329
      $region76: #{yolo_conv_layer.1} parent=5 // pred_check_branch
        %332 = sbr.rel (%p330) target = $region78
      $region77: #{yolo_conv_layer.1} parent=5 // pred_region
        %s333 = ssub.s32 %s9, 2
        // Predicated region
        $region79: #{yolo_conv_layer.1} parent=77 // pred_check
          %p334 = pneg %p106
        $region80: #{yolo_conv_layer.1} parent=77 // pred_check_branch
          %336 = sbr.rel (%p334) target = $region82
        $region81: #{yolo_conv_layer.1} parent=77 // pred_region
          %s337 = smul.u32 2, %s15
          %p338 = scmp.lt.s32.totalorder %s337, 3
          %s339 = scalar_select %p338, %s337, 3
          %s340 = smul.addr %s339, 8
          %s341 = scalar_lea.vmem %s3, %s340
        $region82: #{yolo_conv_layer.1} parent=77 // pred_fallthru
          _
      $region78: #{yolo_conv_layer.1} parent=5 // pred_fallthru
        _
    $region6: #{yolo_conv_layer.1} parent=1 // loop_footer
      %s13 = sadd.s32 1, %s9
    $region7: #{yolo_conv_layer.1} parent=1 // loop_footer_branch
      %8 = sbr.rel target = $region3
    $region8: #{yolo_conv_layer.1} parent=1 // loop_exit
      _

</llo_original>
